<compile_context>
chip_gen: v7x
topology: tpu7x:2x2x1
jax: 0.10.0
libtpu: 0.0.40
codegen_flags: <defaults>
</compile_context>

<pallas_src>
import jax
import jax.numpy as jnp
from jax import lax
from jax.experimental import pallas as pl
from jax.experimental.pallas import tpu as pltpu


# ----------------------------------------------------------------------------
# Tiling helper
# ----------------------------------------------------------------------------
def _choose_row_tile(h, w, need_pool, n_batch, itemsize=4, target_bytes=2 << 20):
    """Pick a row tile TH that divides h.

    * TH == h (full extent, always legal) or TH % align == 0 so every block -
      including the pooled output block with TH//2 rows - obeys the (8,128)
      tiling rule and keeps the even-TH invariant the fused pool relies on.
    * Targets ~2 MiB input blocks (perf review: 1 MiB blocks left 8-15% of the
      HBM roofline on the table; 2-4 MiB is the knee), relaxing up to 2x the
      target, and never collapsing to tiny 16-row blocks (the old fallback
      cliff): if nothing fits 2x target we take the *smallest* aligned divisor
      above it, i.e. bounded overshoot instead of a 2-3x bandwidth regression.
    * When n_batch == 1, prefer a proper divisor so the grid has >= 2 steps and
      both v7x TensorCores get work (harmless on single-TC v5e/v6e).
    """
    align = 16 if need_pool else 8
    if h % align != 0:
        return h                                   # cannot split on a legal boundary
    divs = [th for th in range(align, h + 1, align) if h % th == 0]
    row_bytes = w * itemsize

    def pick(cands):
        if n_batch == 1:
            proper = [th for th in cands if th < h]
            if proper:
                return max(proper)
        return max(cands)

    within = [th for th in divs if th * row_bytes <= target_bytes]
    if within:
        return pick(within)
    relaxed = [th for th in divs if th * row_bytes <= 2 * target_bytes]
    if relaxed:
        return pick(relaxed)
    return min(divs)                               # smallest overshoot, never 16-row crumbs


# ----------------------------------------------------------------------------
# In-kernel helpers
# ----------------------------------------------------------------------------
def _even_rows_select(n_out, n_in, dtype):
    """S with S[i, 2i] = 1, so (S @ x) compacts the even rows of x."""
    i = lax.broadcasted_iota(jnp.int32, (n_out, n_in), 0)
    k = lax.broadcasted_iota(jnp.int32, (n_out, n_in), 1)
    return (k == 2 * i).astype(dtype)


def _even_cols_select(n_in, n_out, dtype):
    """C with C[2j, j] = 1, so (x @ C) compacts the even columns of x."""
    k = lax.broadcasted_iota(jnp.int32, (n_in, n_out), 0)
    j = lax.broadcasted_iota(jnp.int32, (n_in, n_out), 1)
    return (k == 2 * j).astype(dtype)


def _masked_l1_partials(d, s, err, part_ref):
    mask = (s > 0.0).astype(jnp.float32)           # left_valid_mask
    msum = jnp.sum(err * mask)
    cnt = jnp.sum(mask)
    # Single merged partials block: [masked |d-s| sum, valid count].
    part_ref[...] = jnp.concatenate(
        [jnp.full((1, 1, 1, 1), msum, jnp.float32),
         jnp.full((1, 1, 1, 1), cnt, jnp.float32)], axis=3)


# ----------------------------------------------------------------------------
# Kernels
# ----------------------------------------------------------------------------
def _loss_pool_kernel(disp_ref, stereo_ref, err_ref, pooled_ref, part_ref):
    d = disp_ref[...]                              # (1, TH, W)
    s = stereo_ref[...]                            # (1, TH, W)
    err = jnp.abs(d - s)                           # reused for the masked sum
    err_ref[...] = err
    _masked_l1_partials(d, s, err, part_ref)

    # Fused 2x2 / stride-2 max pool of the stereo tile (exact floor pooling).
    x = s[0]                                       # (TH, W) value
    th, w = x.shape
    hh, hw = th // 2, w // 2
    # Row-pair max: even rows hold max(x[2i], x[2i+1]); the roll's circular
    # wrap only lands on odd rows, which the selection matmul discards.
    rm = jnp.maximum(x, jnp.roll(x, -1, axis=0))
    rsel = _even_rows_select(hh, th, jnp.float32)              # (TH//2, TH)
    rm = jnp.dot(rsel, rm, preferred_element_type=jnp.float32)  # (TH//2, W)
    # Column-pair max, same trick along lanes; compaction via MXU matmul keeps
    # everything lane-dense (no masked partial stores, no strided/relayout ops).
    cm = jnp.maximum(rm, jnp.roll(rm, -1, axis=1))
    csel = _even_cols_select(w, hw, jnp.float32)               # (W, W//2)
    pooled_ref[...] = jnp.dot(cm, csel, preferred_element_type=jnp.float32)[None]


def _loss_only_kernel(disp_ref, stereo_ref, err_ref, part_ref):
    d = disp_ref[...]
    s = stereo_ref[...]
    err = jnp.abs(d - s)
    err_ref[...] = err
    _masked_l1_partials(d, s, err, part_ref)


# ----------------------------------------------------------------------------
# Per-level wrapper: one fused pallas_call per pyramid level
# ----------------------------------------------------------------------------
def _level_pass(disp, stereo, pool_next):
    """disp, stereo: (B, H, W) f32.

    Returns (err, [pooled,] partials) where partials is (B, nT, 1, 2) with
    [..., 0] = masked |d-s| sum and [..., 1] = valid count; reduced in the
    caller so both grid axes stay "parallel" (v7x megacore sharding).
    """
    B, H, W = disp.shape
    TH = _choose_row_tile(H, W, pool_next, n_batch=B)
    nT = H // TH
    grid = (B, nT)

    tile_spec = pl.BlockSpec((1, TH, W), lambda b, t: (b, t, 0))
    part_spec = pl.BlockSpec((1, 1, 1, 2), lambda b, t: (b, t, 0, 0))

    in_specs = [tile_spec, tile_spec]
    # TODO(synk): make the full-res error-map output optional (or bf16) when the
    # caller only needs the loss - it is ~1/3 of the level-0 HBM traffic.
    out_shapes = [jax.ShapeDtypeStruct((B, H, W), jnp.float32)]
    out_specs = [tile_spec]
    if pool_next:
        kernel = _loss_pool_kernel
        out_shapes.append(jax.ShapeDtypeStruct((B, H // 2, W // 2), jnp.float32))
        out_specs.append(pl.BlockSpec((1, TH // 2, W // 2), lambda b, t: (b, t, 0)))
    else:
        kernel = _loss_only_kernel
    out_shapes.append(jax.ShapeDtypeStruct((B, nT, 1, 2), jnp.float32))
    out_specs.append(part_spec)

    # Explicit scoped-VMEM budget: double-buffered DMA blocks (~6.5x tile) plus
    # compute temporaries and the in-kernel selection matrices, with headroom.
    # Kept under v7x's 64 MiB/TC physical VMEM.
    tile_bytes = TH * W * 4
    est = 10 * tile_bytes + (3 << 20)
    if pool_next:
        est += 2 * tile_bytes + (W * (W // 2) + TH * (TH // 2)) * 4
    vmem_limit = int(min(56 << 20, max(24 << 20, est)))

    return pl.pallas_call(
        kernel,
        grid=grid,
        in_specs=in_specs,
        out_specs=tuple(out_specs),
        out_shape=tuple(out_shapes),
        compiler_params=pltpu.CompilerParams(
            # Every output block is written exactly once per grid point, so both
            # axes can be "parallel" (2x via megacore on v7x; no-op on v5e/v6e).
            dimension_semantics=("parallel", "parallel"),
            vmem_limit_bytes=vmem_limit),
    )(disp, stereo)


# ----------------------------------------------------------------------------
# MonocularDistillLoss.forward
# ----------------------------------------------------------------------------
def monocular_distill_loss(disp_ests, stereo_disp_est):
    """disp_ests: list of (B,1,H/2^i,W/2^i) f32; stereo_disp_est: (B,1,H,W) f32."""
    assert stereo_disp_est is not None
    nscales = len(disp_ests)

    l1_loss = jnp.float32(0.0)
    distill_disp_errors = []
    stereo_pyr = []
    stereo_cur = stereo_disp_est[:, 0]             # (B, H, W), free squeeze
    for i in range(nscales):
        stereo_pyr.append(stereo_cur)
        pool_next = (i + 1) < nscales
        outs = _level_pass(disp_ests[i][:, 0], stereo_cur, pool_next)
        if pool_next:
            err, stereo_cur, parts = outs          # pooled stereo feeds next level
        else:
            err, parts = outs
        distill_disp_errors.append(err[:, None])   # back to (B,1,h,w)
        # PyTorch `x[mask].mean()` == masked_sum / valid_count.  The /20 scale is
        # hoisted out of the per-element path (|d-s|/20 == |d/20 - s/20| up to a
        # last-ulp rounding).  Empty mask -> NaN, same as PyTorch's empty .mean().
        msum = jnp.sum(parts[..., 0]) * jnp.float32(1.0 / 20.0)
        cnt = jnp.sum(parts[..., 1])
        l1_loss = l1_loss + (msum / cnt) / (2 ** i)

    total_loss = l1_loss
    stereo_disp_ests = [p[:, None] for p in stereo_pyr]   # back to (B,1,h,w)
    return (
        total_loss,
        {"total_loss": total_loss, "l1_loss": l1_loss},
        {"distill_disp_errors": distill_disp_errors,
         "stereo_disp_ests": stereo_disp_ests},
    )


# ----------------------------------------------------------------------------
# Pure-JAX reference (correctness check for the Pallas version)
# ----------------------------------------------------------------------------
def _reference(disp_ests, stereo_disp_est):
    nscales = len(disp_ests)
    pyr = [stereo_disp_est]
    for _ in range(1, nscales):
        pyr.append(
            lax.reduce_window(pyr[-1], -jnp.inf, lax.max,
                              (1, 1, 2, 2), (1, 1, 2, 2), "VALID"))
    l1 = jnp.float32(0.0)
    errs = []
    for i in range(nscales):
        mask = pyr[i] > 0
        diff = jnp.abs(disp_ests[i] / 20.0 - pyr[i] / 20.0)
        l1 = l1 + jnp.sum(jnp.where(mask, diff, 0.0)) / jnp.sum(mask) / (2 ** i)
        errs.append(jnp.abs(disp_ests[i] - pyr[i]))
    return l1, errs, pyr


if __name__ == "__main__":
    key = jax.random.PRNGKey(0)
    B, H, W = 2, 16, 16
    nscales = 4

    keys = jax.random.split(key, nscales + 1)
    disp_ests = [
        jax.random.uniform(keys[i], (B, 1, H // (2 ** i), W // (2 ** i)),
                           dtype=jnp.float32, minval=0.0, maxval=80.0)
        for i in range(nscales)
    ]
    # stereo disparity with some non-positive (invalid) pixels to exercise the mask
    stereo_disp_est = jax.random.uniform(keys[-1], (B, 1, H, W),
                                         dtype=jnp.float32, minval=-10.0, maxval=70.0)

    total_loss, scalar_outputs, image_outputs = monocular_distill_loss(
        disp_ests, stereo_disp_est)
    jax.block_until_ready(total_loss)
    jax.block_until_ready(image_outputs["distill_disp_errors"])
    jax.block_until_ready(image_outputs["stereo_disp_ests"])

    # Validate against pure-JAX reference
    ref_loss, ref_errs, ref_pyr = _reference(disp_ests, stereo_disp_est)
    assert jnp.allclose(total_loss, ref_loss, rtol=1e-5, atol=1e-5)
    for a, b in zip(image_outputs["distill_disp_errors"], ref_errs):
        assert jnp.allclose(a, b, rtol=1e-5, atol=1e-5)
    for a, b in zip(image_outputs["stereo_disp_ests"], ref_pyr):
        assert jnp.allclose(a, b, rtol=1e-5, atol=1e-5)

    print("KERNEL_OK")
</pallas_src>

<mosaic_0001>
module attributes {stable_mosaic.version = 11 : i64} {
  func.func @_loss_pool_kernel(%arg0: i32, %arg1: i32, %arg2: memref<1x16x16xf32, #tpu.memory_space<vmem>>, %arg3: memref<1x16x16xf32, #tpu.memory_space<vmem>>, %arg4: memref<1x16x16xf32, #tpu.memory_space<vmem>>, %arg5: memref<1x8x8xf32, #tpu.memory_space<vmem>>, %arg6: memref<1x1x1x2xf32, #tpu.memory_space<vmem>>) attributes {dimension_semantics = [#tpu.dimension_semantics<parallel>, #tpu.dimension_semantics<parallel>], iteration_bounds = array<i64: 2, 1>, scalar_prefetch = 0 : i64, scratch_operands = 0 : i64, tpu.core_type = #tpu.core_type<tc>, window_params = [{transform_indices = @transform_0, window_bounds = array<i64: 1, 16, 16>}, {transform_indices = @transform_1, window_bounds = array<i64: 1, 16, 16>}, {transform_indices = @transform_2, window_bounds = array<i64: 1, 16, 16>}, {transform_indices = @transform_3, window_bounds = array<i64: 1, 8, 8>}, {transform_indices = @transform_4, window_bounds = array<i64: 1, 1, 1, 2>}]} {
    %c0 = arith.constant 0 : index
    %c0_0 = arith.constant 0 : index
    %c0_1 = arith.constant 0 : index
    %0 = vector.load %arg2[%c0, %c0_0, %c0_1] : memref<1x16x16xf32, #tpu.memory_space<vmem>>, vector<1x16x16xf32>
    %c0_2 = arith.constant 0 : index
    %c0_3 = arith.constant 0 : index
    %c0_4 = arith.constant 0 : index
    %1 = vector.load %arg3[%c0_2, %c0_3, %c0_4] : memref<1x16x16xf32, #tpu.memory_space<vmem>>, vector<1x16x16xf32>
    %2 = arith.subf %0, %1 : vector<1x16x16xf32>
    %3 = math.absf %2 : vector<1x16x16xf32>
    %c0_5 = arith.constant 0 : index
    %c0_6 = arith.constant 0 : index
    %c0_7 = arith.constant 0 : index
    %4 = vector.load %arg4[%c0_5, %c0_6, %c0_7] : memref<1x16x16xf32, #tpu.memory_space<vmem>>, vector<1x16x16xf32>
    tpu.vector_store %arg4[%c0_5, %c0_6, %c0_7], %3 {strides = array<i32>} : memref<1x16x16xf32, #tpu.memory_space<vmem>>, vector<1x16x16xf32>,
    %cst = arith.constant 0.000000e+00 : f32
    %5 = vector.broadcast %cst : f32 to vector<1x16x16xf32>
    %6 = arith.cmpf ogt, %1, %5 : vector<1x16x16xf32>
    %7 = arith.extui %6 : vector<1x16x16xi1> to vector<1x16x16xi32>
    %8 = arith.sitofp %7 : vector<1x16x16xi32> to vector<1x16x16xf32>
    %9 = arith.mulf %3, %8 : vector<1x16x16xf32>
    %10 = vector.shape_cast %9 : vector<1x16x16xf32> to vector<1x1x16x16xf32>
    %cst_8 = arith.constant dense<0.000000e+00> : vector<1xf32>
    %11 = vector.multi_reduction <add>, %10, %cst_8 [1, 2, 3] : vector<1x1x16x16xf32> to vector<1xf32>
    %12 = vector.shape_cast %11 : vector<1xf32> to vector<1x1x1x1xf32>
    %13 = vector.extract %12[0, 0, 0, 0] : f32 from vector<1x1x1x1xf32>
    %14 = vector.shape_cast %8 : vector<1x16x16xf32> to vector<1x1x16x16xf32>
    %cst_9 = arith.constant dense<0.000000e+00> : vector<1xf32>
    %15 = vector.multi_reduction <add>, %14, %cst_9 [1, 2, 3] : vector<1x1x16x16xf32> to vector<1xf32>
    %16 = vector.shape_cast %15 : vector<1xf32> to vector<1x1x1x1xf32>
    %17 = vector.extract %16[0, 0, 0, 0] : f32 from vector<1x1x1x1xf32>
    %18 = vector.broadcast %13 : f32 to vector<1x1x1x1xf32>
    %19 = vector.broadcast %17 : f32 to vector<1x1x1x1xf32>
    %20 = tpu.concatenate %18, %19 in 3 : vector<1x1x1x1xf32>, vector<1x1x1x1xf32> -> vector<1x1x1x2xf32>
    %c0_10 = arith.constant 0 : index
    %c0_11 = arith.constant 0 : index
    %c0_12 = arith.constant 0 : index
    %c0_13 = arith.constant 0 : index
    %21 = vector.load %arg6[%c0_10, %c0_11, %c0_12, %c0_13] : memref<1x1x1x2xf32, #tpu.memory_space<vmem>>, vector<1x1x1x2xf32>
    tpu.vector_store %arg6[%c0_10, %c0_11, %c0_12, %c0_13], %20 {strides = array<i32>} : memref<1x1x1x2xf32, #tpu.memory_space<vmem>>, vector<1x1x1x2xf32>,
    %22 = vector.shape_cast %1 : vector<1x16x16xf32> to vector<16x16xf32>
    %23 = vector.extract_strided_slice %22 {offsets = [1, 0], sizes = [15, 16], strides = [1, 1]} : vector<16x16xf32> to vector<15x16xf32>
    %24 = vector.extract_strided_slice %22 {offsets = [0, 0], sizes = [1, 16], strides = [1, 1]} : vector<16x16xf32> to vector<1x16xf32>
    %25 = tpu.concatenate %23, %24 in 0 : vector<15x16xf32>, vector<1x16xf32> -> vector<16x16xf32>
    %26 = arith.maximumf %22, %25 : vector<16x16xf32>
    %27 = tpu.iota {dimensions = array<i32: 0>} : vector<8x16xi32>
    %28 = tpu.iota {dimensions = array<i32: 1>} : vector<8x16xi32>
    %c2_i32 = arith.constant 2 : i32
    %29 = vector.broadcast %c2_i32 : i32 to vector<8x16xi32>
    %30 = arith.muli %29, %27 : vector<8x16xi32>
    %31 = arith.cmpi eq, %28, %30 : vector<8x16xi32>
    %32 = arith.extui %31 : vector<8x16xi1> to vector<8x16xi32>
    %33 = arith.sitofp %32 : vector<8x16xi32> to vector<8x16xf32>
    %cst_14 = arith.constant dense<0.000000e+00> : vector<8x16xf32>
    %34 = tpu.matmul %33, %26, %cst_14 {dimension_numbers = #tpu.dot_dimension_numbers<[1], [0], [0], [1], [0, 0, 1, 1], [], []>} : vector<8x16xf32>, vector<16x16xf32>, vector<8x16xf32> -> vector<8x16xf32>
    %35 = vector.extract_strided_slice %34 {offsets = [0, 1], sizes = [8, 15], strides = [1, 1]} : vector<8x16xf32> to vector<8x15xf32>
    %36 = vector.extract_strided_slice %34 {offsets = [0, 0], sizes = [8, 1], strides = [1, 1]} : vector<8x16xf32> to vector<8x1xf32>
    %37 = tpu.concatenate %35, %36 in 1 : vector<8x15xf32>, vector<8x1xf32> -> vector<8x16xf32>
    %38 = arith.maximumf %34, %37 : vector<8x16xf32>
    %39 = tpu.iota {dimensions = array<i32: 0>} : vector<16x8xi32>
    %40 = tpu.iota {dimensions = array<i32: 1>} : vector<16x8xi32>
    %c2_i32_15 = arith.constant 2 : i32
    %41 = vector.broadcast %c2_i32_15 : i32 to vector<16x8xi32>
    %42 = arith.muli %41, %40 : vector<16x8xi32>
    %43 = arith.cmpi eq, %39, %42 : vector<16x8xi32>
    %44 = arith.extui %43 : vector<16x8xi1> to vector<16x8xi32>
    %45 = arith.sitofp %44 : vector<16x8xi32> to vector<16x8xf32>
    %cst_16 = arith.constant dense<0.000000e+00> : vector<8x8xf32>
    %46 = tpu.matmul %38, %45, %cst_16 {dimension_numbers = #tpu.dot_dimension_numbers<[1], [0], [0], [1], [0, 0, 1, 1], [], []>} : vector<8x16xf32>, vector<16x8xf32>, vector<8x8xf32> -> vector<8x8xf32>
    %47 = vector.shape_cast %46 : vector<8x8xf32> to vector<1x8x8xf32>
    %c0_17 = arith.constant 0 : index
    %c0_18 = arith.constant 0 : index
    %c0_19 = arith.constant 0 : index
    %48 = vector.load %arg5[%c0_17, %c0_18, %c0_19] : memref<1x8x8xf32, #tpu.memory_space<vmem>>, vector<1x8x8xf32>
    tpu.vector_store %arg5[%c0_17, %c0_18, %c0_19], %47 {strides = array<i32>} : memref<1x8x8xf32, #tpu.memory_space<vmem>>, vector<1x8x8xf32>,
    return
  }
  func.func @transform_0(%arg0: i32, %arg1: i32) -> (i32, i32, i32) {
    %c0_i32 = arith.constant 0 : i32
    %c0_i32_0 = arith.constant 0 : i32
    return %arg0, %arg1, %c0_i32 : i32, i32, i32
  }
  func.func @transform_1(%arg0: i32, %arg1: i32) -> (i32, i32, i32) {
    %c0_i32 = arith.constant 0 : i32
    %c0_i32_0 = arith.constant 0 : i32
    return %arg0, %arg1, %c0_i32 : i32, i32, i32
  }
  func.func @transform_2(%arg0: i32, %arg1: i32) -> (i32, i32, i32) {
    %c0_i32 = arith.constant 0 : i32
    %c0_i32_0 = arith.constant 0 : i32
    return %arg0, %arg1, %c0_i32 : i32, i32, i32
  }
  func.func @transform_3(%arg0: i32, %arg1: i32) -> (i32, i32, i32) {
    %c0_i32 = arith.constant 0 : i32
    %c0_i32_0 = arith.constant 0 : i32
    return %arg0, %arg1, %c0_i32 : i32, i32, i32
  }
  func.func @transform_4(%arg0: i32, %arg1: i32) -> (i32, i32, i32, i32) {
    %c0_i32 = arith.constant 0 : i32
    %c0_i32_0 = arith.constant 0 : i32
    %c0_i32_1 = arith.constant 0 : i32
    return %arg0, %arg1, %c0_i32, %c0_i32_0 : i32, i32, i32, i32
  }
}

</mosaic_0001>

<llo_original>
// kernel: tpu_custom_call.1
$region0: #{tpu_custom_call.1}
  #allocation0 [shape = 'u32[]', space=smem, size = 0x4, offset = 0x4, fixed_abs, tag = 'smem constant byte address 0x4 - core index']
  #allocation1 [shape = 'u32[144,128]{1,0:T(1,128)}', space=vmem, size = 0x12000, scoped, tag = 'internal scratch']
  %s0 = inlined_call_operand.hbm [shape: f32[2,16,16], index: 0, kind: input, shape index: {}]
  %s1 = inlined_call_operand.hbm [shape: f32[2,16,16], index: 1, kind: input, shape index: {}]
  %s2 = inlined_call_operand.hbm [shape: f32[2,16,16], index: 2, kind: output, shape index: {0}]
  %s3 = inlined_call_operand.hbm [shape: f32[2,8,8], index: 3, kind: output, shape index: {1}]
  %s4 = inlined_call_operand.hbm [shape: f32[2,1,1,2], index: 4, kind: output, shape index: {2}]
  %5 = xla_tuple %s2, %s3, %s4
  %s6 = sld [smem:[#allocation0]]
  $region65: #{tpu_custom_call.1} parent=0
    _
  %s8 = ssub.s32 1, %s6
  %s9 = scalar_select 0, %s8, %s6
  $region1: #{tpu_custom_call.1} parent=0
    #allocation2 [shape = 'u8[16384]{0}', space=vmem, size = 0x4000, scoped, tag = 'input window, operand 0']
    #allocation3 [shape = 's32[2]{0}', space=sflag, size = 0x8, scoped, tag = 'scoped memory for tpu_custom_call.1']
    #allocation4 [shape = 's32[2]{0}', space=sflag, size = 0x8, scoped, tag = 'scoped memory for tpu_custom_call.1']
    #allocation5 [shape = 'u8[16384]{0}', space=vmem, size = 0x4000, scoped, tag = 'input window, operand 1']
    #allocation6 [shape = 's32[2]{0}', space=sflag, size = 0x8, scoped, tag = 'scoped memory for tpu_custom_call.1']
    #allocation7 [shape = 'u8[16384]{0}', space=vmem, size = 0x4000, scoped, tag = 'output window, operand 0']
    #allocation8 [shape = 'u8[8192]{0}', space=vmem, size = 0x2000, scoped, tag = 'output window, operand 1']
    #allocation9 [shape = 's32[2]{0}', space=sflag, size = 0x8, scoped, tag = 'scoped memory for tpu_custom_call.1']
    #allocation10 [shape = 'u8[1024]{0}', space=vmem, size = 0x400, scoped, tag = 'output window, operand 2']
    %10 = vsyncpa [#allocation3], 0
    %s11 = scalar_lea.sflag [#allocation3], 1
    %12 = vsyncpa %s11, 0
    %13 = vsyncpa [#allocation6], 0
    %s14 = scalar_lea.sflag [#allocation6], 1
    %15 = vsyncpa %s14, 0
    %16 = vsyncpa [#allocation4], 0
    %s17 = scalar_lea.sflag [#allocation4], 1
    %18 = vsyncpa %s17, 0
    %19 = vsyncpa [#allocation9], 0
    %s20 = scalar_lea.sflag [#allocation9], 1
    %21 = vsyncpa %s20, 0
    loop: start=0, step=1, limit=4
    $region2: #{tpu_custom_call.1} parent=1 // loop_pre_header
      _
    $region3: #{tpu_custom_call.1} parent=1 // loop_header
      %s23 = sphi 0, %s27
      %p24 = scmp.ge.s32.totalorder %s23, 4
      %s30 = sphi 0, %s42
      %s31 = sphi 0, %s38
      %s32 = sphi 0, %s30
      %s33 = sphi 0, %s31
      %s34 = sphi 0, %s32
      %s35 = sphi 0, %s33
      %s47 = sphi 0, %s49
      %s50 = sphi 0, %s47
      %s51 = sphi 0, %s50
      %s67 = sphi 0, %s51
      %s75 = sphi 0, %s77
      %s78 = sphi 0, %s75
      %s79 = sphi 0, %s78
      %s95 = sphi 0, %s79
      %s103 = sphi 0, %s105
      %s106 = sphi 0, %s103
      %s107 = sphi 0, %s106
      %s123 = sphi 0, %s107
      %s131 = sphi 0, %s133
      %s134 = sphi 0, %s131
      %s135 = sphi 0, %s134
      %s151 = sphi 0, %s135
      %s159 = sphi 0, %s161
      %s162 = sphi 0, %s159
      %s163 = sphi 0, %s162
      %s179 = sphi 0, %s163
    $region4: #{tpu_custom_call.1} parent=1 // loop_header_branch
      %26 = sbr.rel (%p24) target = $region8
    $region5: #{tpu_custom_call.1} parent=1 // loop_body
      %s28 = ssub.s32 %s23, 1
      %s29 = ssub.s32 %s23, 2
      %s36 = sadd.s32 1, %s31
      %p37 = scmp.ge.s32.totalorder %s36, 1
      %s38 = scalar_select %p37, 0, %s36
      %s39 = sadd.s32 1, %s30
      %s40 = scalar_select %p37, %s39, %s30
      %p41 = scmp.ge.s32.totalorder %s40, 2
      %s42 = scalar_select %p41, 0, %s40
      %s43 = ssub.s32 %s30, %s42
      %s44 = ssub.s32 %s31, %s38
      %s45 = sor.u32 %s43, %s44
      %p46 = scmp.eq.s32.totalorder %s45, 0
      %s48 = sadd.s32 %s47, 1
      %s49 = scalar_select %p46, %s47, %s48
      %p52 = pneg %p46
      %p53 = scmp.eq.s32.totalorder %s23, 1
      %p54 = por %p52, %p53
      %p55 = scmp.ne.s32.totalorder %s47, %s50
      %p56 = scmp.eq.s32.totalorder %s23, 0
      %p57 = por %p55, %p56
      %p58 = scmp.ne.s32.totalorder %s47, %s50
      %p59 = scmp.eq.s32.totalorder %s28, 1
      %p60 = por %p58, %p59
      %p61 = scmp.ne.s32.totalorder %s50, %s51
      %p62 = scmp.eq.s32.totalorder %s28, 0
      %p63 = por %p61, %p62
      %p64 = scmp.ne.s32.totalorder %s50, %s51
      %p65 = scmp.eq.s32.totalorder %s29, 1
      %p66 = por %p64, %p65
      %p68 = scmp.ne.s32.totalorder %s51, %s67
      %p69 = scmp.eq.s32.totalorder %s29, 0
      %p70 = por %p68, %p69
      %s71 = ssub.s32 %s30, %s42
      %s72 = ssub.s32 %s31, %s38
      %s73 = sor.u32 %s71, %s72
      %p74 = scmp.eq.s32.totalorder %s73, 0
      %s76 = sadd.s32 %s75, 1
      %s77 = scalar_select %p74, %s75, %s76
      %p80 = pneg %p74
      %p81 = scmp.eq.s32.totalorder %s23, 1
      %p82 = por %p80, %p81
      %p83 = scmp.ne.s32.totalorder %s75, %s78
      %p84 = scmp.eq.s32.totalorder %s23, 0
      %p85 = por %p83, %p84
      %p86 = scmp.ne.s32.totalorder %s75, %s78
      %p87 = scmp.eq.s32.totalorder %s28, 1
      %p88 = por %p86, %p87
      %p89 = scmp.ne.s32.totalorder %s78, %s79
      %p90 = scmp.eq.s32.totalorder %s28, 0
      %p91 = por %p89, %p90
      %p92 = scmp.ne.s32.totalorder %s78, %s79
      %p93 = scmp.eq.s32.totalorder %s29, 1
      %p94 = por %p92, %p93
      %p96 = scmp.ne.s32.totalorder %s79, %s95
      %p97 = scmp.eq.s32.totalorder %s29, 0
      %p98 = por %p96, %p97
      %s99 = ssub.s32 %s30, %s42
      %s100 = ssub.s32 %s31, %s38
      %s101 = sor.u32 %s99, %s100
      %p102 = scmp.eq.s32.totalorder %s101, 0
      %s104 = sadd.s32 %s103, 1
      %s105 = scalar_select %p102, %s103, %s104
      %p108 = pneg %p102
      %p109 = scmp.eq.s32.totalorder %s23, 1
      %p110 = por %p108, %p109
      %p111 = scmp.ne.s32.totalorder %s103, %s106
      %p112 = scmp.eq.s32.totalorder %s23, 0
      %p113 = por %p111, %p112
      %p114 = scmp.ne.s32.totalorder %s103, %s106
      %p115 = scmp.eq.s32.totalorder %s28, 1
      %p116 = por %p114, %p115
      %p117 = scmp.ne.s32.totalorder %s106, %s107
      %p118 = scmp.eq.s32.totalorder %s28, 0
      %p119 = por %p117, %p118
      %p120 = scmp.ne.s32.totalorder %s106, %s107
      %p121 = scmp.eq.s32.totalorder %s29, 1
      %p122 = por %p120, %p121
      %p124 = scmp.ne.s32.totalorder %s107, %s123
      %p125 = scmp.eq.s32.totalorder %s29, 0
      %p126 = por %p124, %p125
      %s127 = ssub.s32 %s30, %s42
      %s128 = ssub.s32 %s31, %s38
      %s129 = sor.u32 %s127, %s128
      %p130 = scmp.eq.s32.totalorder %s129, 0
      %s132 = sadd.s32 %s131, 1
      %s133 = scalar_select %p130, %s131, %s132
      %p136 = pneg %p130
      %p137 = scmp.eq.s32.totalorder %s23, 1
      %p138 = por %p136, %p137
      %p139 = scmp.ne.s32.totalorder %s131, %s134
      %p140 = scmp.eq.s32.totalorder %s23, 0
      %p141 = por %p139, %p140
      %p142 = scmp.ne.s32.totalorder %s131, %s134
      %p143 = scmp.eq.s32.totalorder %s28, 1
      %p144 = por %p142, %p143
      %p145 = scmp.ne.s32.totalorder %s134, %s135
      %p146 = scmp.eq.s32.totalorder %s28, 0
      %p147 = por %p145, %p146
      %p148 = scmp.ne.s32.totalorder %s134, %s135
      %p149 = scmp.eq.s32.totalorder %s29, 1
      %p150 = por %p148, %p149
      %p152 = scmp.ne.s32.totalorder %s135, %s151
      %p153 = scmp.eq.s32.totalorder %s29, 0
      %p154 = por %p152, %p153
      %s155 = ssub.s32 %s30, %s42
      %s156 = ssub.s32 %s31, %s38
      %s157 = sor.u32 %s155, %s156
      %p158 = scmp.eq.s32.totalorder %s157, 0
      %s160 = sadd.s32 %s159, 1
      %s161 = scalar_select %p158, %s159, %s160
      %p164 = pneg %p158
      %p165 = scmp.eq.s32.totalorder %s23, 1
      %p166 = por %p164, %p165
      %p167 = scmp.ne.s32.totalorder %s159, %s162
      %p168 = scmp.eq.s32.totalorder %s23, 0
      %p169 = por %p167, %p168
      %p170 = scmp.ne.s32.totalorder %s159, %s162
      %p171 = scmp.eq.s32.totalorder %s28, 1
      %p172 = por %p170, %p171
      %p173 = scmp.ne.s32.totalorder %s162, %s163
      %p174 = scmp.eq.s32.totalorder %s28, 0
      %p175 = por %p173, %p174
      %p176 = scmp.ne.s32.totalorder %s162, %s163
      %p177 = scmp.eq.s32.totalorder %s29, 1
      %p178 = por %p176, %p177
      %p180 = scmp.ne.s32.totalorder %s163, %s179
      %p181 = scmp.eq.s32.totalorder %s29, 0
      %p182 = por %p180, %p181
      %p183 = scmp.le.s32.totalorder 1, %s23
      %p184 = scmp.lt.s32.totalorder %s23, 3
      %p185 = pnand %p183, %p184
      %p186 = pneg %p185
      // Predicated region
      $region9: #{tpu_custom_call.1} parent=5 // pred_check
        _
      $region10: #{tpu_custom_call.1} parent=5 // pred_check_branch
        %188 = sbr.rel (%p185) target = $region12
      $region11: #{tpu_custom_call.1} parent=5 // pred_region
        %s189 = ssub.s32 %s23, 1
      $region12: #{tpu_custom_call.1} parent=5 // pred_fallthru
        _
      %p190 = scmp.lt.s32.totalorder %s23, 2
      // Predicated region
      $region13: #{tpu_custom_call.1} parent=5 // pred_check
        %p191 = pneg %p190
      $region14: #{tpu_custom_call.1} parent=5 // pred_check_branch
        %193 = sbr.rel (%p191) target = $region16
      $region15: #{tpu_custom_call.1} parent=5 // pred_region
        // Predicated region
        $region17: #{tpu_custom_call.1} parent=15 // pred_check
          %p194 = pneg %p57
        $region18: #{tpu_custom_call.1} parent=15 // pred_check_branch
          %196 = sbr.rel (%p194) target = $region20
        $region19: #{tpu_custom_call.1} parent=15 // pred_region
          %s197 = sand.u32 %s47, 1
          %s198 = scalar_lea.sflag [#allocation3], %s197
          %s199 = sand.u32 %s47, 1
          %s200 = smul.addr %s199, 16
          %s201 = scalar_lea.vmem [#allocation2], %s200
          %s202 = smul.u32 2, %s31
          %s204 = ssub.s32 256, 256
          %205 = vsyncadd %s198, %s204
          %s206 = smul.addr %s30, 2
          %s207 = sadd.s32 %s202, %s206
          %s208 = smul.addr %s207, 128
          %s209 = scalar_lea.hbm %s0, %s208
          %s210 = sshll.u32 %s201, 4
          %s211 = int_to_ptr.vmem [resolvable:$true] %s210
          %216 = dma.hbm_to_vmem [thread:$0]  %s209, 256, %s211, %s198, 128, 128, 8
        $region20: #{tpu_custom_call.1} parent=15 // pred_fallthru
          _
        // Predicated region
        $region21: #{tpu_custom_call.1} parent=15 // pred_check
          %p217 = pneg %p85
        $region22: #{tpu_custom_call.1} parent=15 // pred_check_branch
          %219 = sbr.rel (%p217) target = $region24
        $region23: #{tpu_custom_call.1} parent=15 // pred_region
          %s220 = sand.u32 %s75, 1
          %s221 = scalar_lea.sflag [#allocation6], %s220
          %s222 = sand.u32 %s75, 1
          %s223 = smul.addr %s222, 16
          %s224 = scalar_lea.vmem [#allocation5], %s223
          %s225 = smul.u32 2, %s31
          %s227 = ssub.s32 256, 256
          %228 = vsyncadd %s221, %s227
          %s229 = smul.addr %s30, 2
          %s230 = sadd.s32 %s225, %s229
          %s231 = smul.addr %s230, 128
          %s232 = scalar_lea.hbm %s1, %s231
          %s233 = sshll.u32 %s224, 4
          %s234 = int_to_ptr.vmem [resolvable:$true] %s233
          %239 = dma.hbm_to_vmem [thread:$0]  %s232, 256, %s234, %s221, 128, 128, 8
        $region24: #{tpu_custom_call.1} parent=15 // pred_fallthru
          _
      $region16: #{tpu_custom_call.1} parent=5 // pred_fallthru
        _
      %p240 = scmp.le.s32.totalorder 1, %s23
      %p241 = scmp.lt.s32.totalorder %s23, 3
      %p242 = pnand %p240, %p241
      %p243 = pneg %p242
      // Predicated region
      $region25: #{tpu_custom_call.1} parent=5 // pred_check
        _
      $region26: #{tpu_custom_call.1} parent=5 // pred_check_branch
        %245 = sbr.rel (%p242) target = $region28
      $region27: #{tpu_custom_call.1} parent=5 // pred_region
        %s246 = ssub.s32 %s23, 1
        %s247 = sand.u32 %s50, 1
        %s248 = scalar_lea.sflag [#allocation3], %s247
        %s249 = sand.u32 %s50, 1
        %s250 = smul.addr %s249, 16
        %s251 = scalar_lea.vmem [#allocation2], %s250
        // Predicated region
        $region29: #{tpu_custom_call.1} parent=27 // pred_check
          %p252 = pneg %p63
        $region30: #{tpu_custom_call.1} parent=27 // pred_check_branch
          %254 = sbr.rel (%p252) target = $region32
        $region31: #{tpu_custom_call.1} parent=27 // pred_region
          %255 = dma.done %s248, 256
        $region32: #{tpu_custom_call.1} parent=27 // pred_fallthru
          _
        %s256 = sand.u32 %s78, 1
        %s257 = scalar_lea.sflag [#allocation6], %s256
        %s258 = sand.u32 %s78, 1
        %s259 = smul.addr %s258, 16
        %s260 = scalar_lea.vmem [#allocation5], %s259
        // Predicated region
        $region33: #{tpu_custom_call.1} parent=27 // pred_check
          %p261 = pneg %p91
        $region34: #{tpu_custom_call.1} parent=27 // pred_check_branch
          %263 = sbr.rel (%p261) target = $region36
        $region35: #{tpu_custom_call.1} parent=27 // pred_region
          %264 = dma.done %s257, 256
        $region36: #{tpu_custom_call.1} parent=27 // pred_fallthru
          _
        %s265 = sand.u32 %s50, 1
        %s266 = scalar_lea.sflag [#allocation3], %s265
        %s267 = sand.u32 %s50, 1
        %s268 = smul.addr %s267, 16
        %s269 = scalar_lea.vmem [#allocation2], %s268
        %p270 = pneg %p63
        %p271 = pneg %p60
        %s272 = sand.u32 %s78, 1
        %s273 = scalar_lea.sflag [#allocation6], %s272
        %s274 = sand.u32 %s78, 1
        %s275 = smul.addr %s274, 16
        %s276 = scalar_lea.vmem [#allocation5], %s275
        %p277 = pneg %p91
        %p278 = pneg %p88
        %p279 = pneg %p119
        %p280 = pneg %p116
        %s281 = sand.u32 %s106, 1
        %s282 = scalar_lea.sflag [#allocation4], %s281
        %s283 = sand.u32 %s106, 1
        %s284 = smul.addr %s283, 16
        %s285 = scalar_lea.vmem [#allocation7], %s284
        %p286 = pneg %p147
        %p287 = pneg %p144
        %s288 = sand.u32 %s28, 1
        %s289 = scalar_lea.sflag [#allocation9], %s288
        %s290 = sand.u32 %s134, 1
        %s291 = smul.addr %s290, 8
        %s292 = scalar_lea.vmem [#allocation8], %s291
        %p293 = pneg %p175
        %p294 = pneg %p172
        %s295 = sand.u32 %s28, 1
        %s296 = scalar_lea.sflag [#allocation9], %s295
        %s297 = sand.u32 %s162, 1
        %s298 = scalar_lea.vmem [#allocation10], %s297
        %s299 = smul.u32 2, %s33
        %s300 = smul.u32 2, %s33
        %s301 = smul.u32 2, %s33
        %v302 = vld [vmem:[%s251] sm:$0xff]
        %v303 = vld [vmem:[%s251 + $0x8] sm:$0xff]
        %v304 = vld [vmem:[%s260] sm:$0xff]
        %v305 = vld [vmem:[%s260 + $0x8] sm:$0xff]
        %v306 = vsub.f32 %v302, %v304
        %v307 = vsub.f32 %v303, %v305
        %v308 = vand.u32 2147483647, %v306
        %v309 = vand.u32 2147483647, %v307
        %vm310 = vcmask 130048
        %311 = vst.msk [vmem:[%s285] sm:$0xff] %vm310, %v308
        %312 = vst.msk [vmem:[%s285 + $0x8] sm:$0xff] %vm310, %v309
        %vm313 = vcmp.gt.f32.partialorder %v304, 0.0
        %vm314 = vcmp.gt.f32.partialorder %v305, 0.0
        %v315 = vsel %vm313, 1, 0
        %v316 = vsel %vm314, 1, 0
        %v317 = vcvt.s32.f32 %v315
        %v318 = vcvt.s32.f32 %v316
        %v319 = vmul.f32 %v308, %v317
        %v320 = vmul.f32 %v309, %v318
        %v321 = vsel %vm310, %v319, 0.0
        %v322 = vsel %vm310, %v320, 0.0
        %v323 = vadd.f32 %v321, %v322
        %324 = vadd.xlane.f32.xlu0 %v323
        %v325 = vpop.xlane.xlu0 %324
        %v326 = vrot.slane %v325, 4
        %v327 = vadd.f32 %v325, %v326
        %v328 = vrot.slane %v327, 2
        %v329 = vadd.f32 %v327, %v328
        %v330 = vrot.slane %v329, 1
        %v331 = vadd.f32 %v329, %v330
        %s332 = vtos %v331
        %v333 = vsel %vm310, %v317, 0.0
        %v334 = vsel %vm310, %v318, 0.0
        %v335 = vadd.f32 %v333, %v334
        %336 = vadd.xlane.f32.xlu0 %v335
        %v337 = vpop.xlane.xlu0 %336
        %v338 = vrot.slane %v337, 4
        %v339 = vadd.f32 %v337, %v338
        %v340 = vrot.slane %v339, 2
        %v341 = vadd.f32 %v339, %v340
        %v342 = vrot.slane %v341, 1
        %v343 = vadd.f32 %v341, %v342
        %s344 = vtos %v343
        %v345 = vstv %s332
        %v346 = vstv %s344
        %vm347 = vcmask 7168
        %v348 = vsel %vm347, %v345, %v346
        %vm349 = vcmask 8192
        %350 = vst.msk [vmem:[%s298] sm:$0x1] %vm349, %v348
        %vm353 = vcmask 1046528
        %v354 = vrot.slane %v304, 1
        %v355 = vrot.slane %v305, 1
        %v356 = vsel %vm353, %v354, %v355
        %v360 = vsel %vm353, %v355, %v354
        %v361 = vmax.f32 %v304, %v356
        %v362 = vmax.f32 %v305, %v360
        %v363 = vlaneseq
        %v364 = vshrl.u32 %v363, 7
        %v365 = vlaneseq
        %v366 = vand.u32 %v365, 127
        %v367 = vmul.u32 %v364, 2
        %vm368 = vcmp.eq.s32.totalorder %v366, %v367
        %v369 = vsel %vm368, 1, 0
        %v370 = vcvt.s32.f32 %v369
        %v372 = vsel %vm310, %v370, 0
        %374 = vmatprep.subr.mxu0 0.0
        %375 = vmatpush1.msra.mxu0 %v361
        %376 = vmatprep.subr.mxu0 0.0
        %377 = vmatpush1.msra.mxu0 %v362
        %378 = vmatprep.subr.mxu0 0.0
        %379 = vmatpush1.msra.mxu0 0.0
        %380 = vmatprep.subr.mxu0 0.0
        %381 = vmatpush1.msra.mxu0 0.0
        %382 = vmatprep.subr.mxu0 0.0
        %383 = vmatpush1.msra.mxu0 0.0
        %384 = vmatprep.subr.mxu0 0.0
        %385 = vmatpush1.msra.mxu0 0.0
        %386 = vmatprep.subr.mxu0 0.0
        %387 = vmatpush1.msra.mxu0 0.0
        %388 = vmatprep.subr.mxu0 0.0
        %389 = vmatpush1.msra.mxu0 0.0
        %390 = vmatprep.subr.mxu0 0.0
        %391 = vmatpush1.msra.mxu0 0.0
        %392 = vmatprep.subr.mxu0 0.0
        %393 = vmatpush1.msra.mxu0 0.0
        %394 = vmatprep.subr.mxu0 0.0
        %395 = vmatpush1.msra.mxu0 0.0
        %396 = vmatprep.subr.mxu0 0.0
        %397 = vmatpush1.msra.mxu0 0.0
        %398 = vmatprep.subr.mxu0 0.0
        %399 = vmatpush1.msra.mxu0 0.0
        %400 = vmatprep.subr.mxu0 0.0
        %401 = vmatpush1.msra.mxu0 0.0
        %402 = vmatprep.subr.mxu0 0.0
        %403 = vmatpush1.msra.mxu0 0.0
        %404 = vmatprep.subr.mxu0 0.0
        %405 = vmatpush1.msra.mxu0 0.0
        %406 = vmatprep.subr.mxu0 0.0
        %407 = vmatpush1.msra.mxu0 0.0
        %408 = vmatprep.subr.mxu0 0.0
        %409 = vmatpush1.msra.mxu0 0.0
        %410 = vmatprep.subr.mxu0 0.0
        %411 = vmatpush1.msra.mxu0 0.0
        %412 = vmatprep.subr.mxu0 0.0
        %413 = vmatpush1.msra.mxu0 0.0
        %414 = vmatprep.subr.mxu0 0.0
        %415 = vmatpush1.msra.mxu0 0.0
        %416 = vmatprep.subr.mxu0 0.0
        %417 = vmatpush1.msra.mxu0 0.0
        %418 = vmatprep.subr.mxu0 0.0
        %419 = vmatpush1.msra.mxu0 0.0
        %420 = vmatprep.subr.mxu0 0.0
        %421 = vmatpush1.msra.mxu0 0.0
        %422 = vmatprep.subr.mxu0 0.0
        %423 = vmatpush1.msra.mxu0 0.0
        %424 = vmatprep.subr.mxu0 0.0
        %425 = vmatpush1.msra.mxu0 0.0
        %426 = vmatprep.subr.mxu0 0.0
        %427 = vmatpush1.msra.mxu0 0.0
        %428 = vmatprep.subr.mxu0 0.0
        %429 = vmatpush1.msra.mxu0 0.0
        %430 = vmatprep.subr.mxu0 0.0
        %431 = vmatpush1.msra.mxu0 0.0
        %432 = vmatprep.subr.mxu0 0.0
        %433 = vmatpush1.msra.mxu0 0.0
        %434 = vmatprep.subr.mxu0 0.0
        %435 = vmatpush1.msra.mxu0 0.0
        %436 = vmatprep.subr.mxu0 0.0
        %437 = vmatpush1.msra.mxu0 0.0
        %438 = vmatprep.mubr.f32.mxu0 0.0
        %439 = vmatmul.mubr.f32.gmra.mrb[0].mxu0 %v372
        %v440 = vpop.f32.mrb[0].mxu0
        %v441 = vadd.f32 0.0, %v440
        %v442 = vpop.f32.mrb[0].mxu0
        %443 = vdwg.mxu0
        %445 = vrot.lane.b32.xlu0 %v441, 127
        %v446 = vpop.permute.xlu0 %445
        %448 = vrot.lane.b32.xlu0 %v441, 15
        %v449 = vpop.permute.xlu0 %448
        %vm451 = vcmask 121856
        %v452 = vsel %vm451, %v446, %v449
        %v453 = vmax.f32 %v441, %v452
        %v454 = vadd.s32 %v364, 8
        %v455 = vmul.u32 %v366, 2
        %vm456 = vcmp.eq.s32.totalorder %v364, %v455
        %vm457 = vcmp.eq.s32.totalorder %v454, %v455
        %v458 = vsel %vm456, 1, 0
        %v459 = vsel %vm457, 1, 0
        %v460 = vcvt.s32.f32 %v458
        %v461 = vcvt.s32.f32 %v459
        %v463 = vsel %vm310, %v453, 0
        %465 = vmatprep.subr.mxu0 0.0
        %466 = vmatpush1.msra.mxu0 %v460
        %467 = vmatprep.subr.mxu0 0.0
        %468 = vmatpush1.msra.mxu0 %v461
        %469 = vmatprep.subr.mxu0 0.0
        %470 = vmatpush1.msra.mxu0 0.0
        %471 = vmatprep.subr.mxu0 0.0
        %472 = vmatpush1.msra.mxu0 0.0
        %473 = vmatprep.subr.mxu0 0.0
        %474 = vmatpush1.msra.mxu0 0.0
        %475 = vmatprep.subr.mxu0 0.0
        %476 = vmatpush1.msra.mxu0 0.0
        %477 = vmatprep.subr.mxu0 0.0
        %478 = vmatpush1.msra.mxu0 0.0
        %479 = vmatprep.subr.mxu0 0.0
        %480 = vmatpush1.msra.mxu0 0.0
        %481 = vmatprep.subr.mxu0 0.0
        %482 = vmatpush1.msra.mxu0 0.0
        %483 = vmatprep.subr.mxu0 0.0
        %484 = vmatpush1.msra.mxu0 0.0
        %485 = vmatprep.subr.mxu0 0.0
        %486 = vmatpush1.msra.mxu0 0.0
        %487 = vmatprep.subr.mxu0 0.0
        %488 = vmatpush1.msra.mxu0 0.0
        %489 = vmatprep.subr.mxu0 0.0
        %490 = vmatpush1.msra.mxu0 0.0
        %491 = vmatprep.subr.mxu0 0.0
        %492 = vmatpush1.msra.mxu0 0.0
        %493 = vmatprep.subr.mxu0 0.0
        %494 = vmatpush1.msra.mxu0 0.0
        %495 = vmatprep.subr.mxu0 0.0
        %496 = vmatpush1.msra.mxu0 0.0
        %497 = vmatprep.subr.mxu0 0.0
        %498 = vmatpush1.msra.mxu0 0.0
        %499 = vmatprep.subr.mxu0 0.0
        %500 = vmatpush1.msra.mxu0 0.0
        %501 = vmatprep.subr.mxu0 0.0
        %502 = vmatpush1.msra.mxu0 0.0
        %503 = vmatprep.subr.mxu0 0.0
        %504 = vmatpush1.msra.mxu0 0.0
        %505 = vmatprep.subr.mxu0 0.0
        %506 = vmatpush1.msra.mxu0 0.0
        %507 = vmatprep.subr.mxu0 0.0
        %508 = vmatpush1.msra.mxu0 0.0
        %509 = vmatprep.subr.mxu0 0.0
        %510 = vmatpush1.msra.mxu0 0.0
        %511 = vmatprep.subr.mxu0 0.0
        %512 = vmatpush1.msra.mxu0 0.0
        %513 = vmatprep.subr.mxu0 0.0
        %514 = vmatpush1.msra.mxu0 0.0
        %515 = vmatprep.subr.mxu0 0.0
        %516 = vmatpush1.msra.mxu0 0.0
        %517 = vmatprep.subr.mxu0 0.0
        %518 = vmatpush1.msra.mxu0 0.0
        %519 = vmatprep.subr.mxu0 0.0
        %520 = vmatpush1.msra.mxu0 0.0
        %521 = vmatprep.subr.mxu0 0.0
        %522 = vmatpush1.msra.mxu0 0.0
        %523 = vmatprep.subr.mxu0 0.0
        %524 = vmatpush1.msra.mxu0 0.0
        %525 = vmatprep.subr.mxu0 0.0
        %526 = vmatpush1.msra.mxu0 0.0
        %527 = vmatprep.subr.mxu0 0.0
        %528 = vmatpush1.msra.mxu0 0.0
        %529 = vmatprep.mubr.f32.mxu0 0.0
        %530 = vmatmul.mubr.f32.gmra.mrb[0].mxu0 %v463
        %v531 = vpop.f32.mrb[0].mxu0
        %v532 = vadd.f32 0.0, %v531
        %v533 = vpop.f32.mrb[0].mxu0
        %534 = vdwg.mxu0
        %vm535 = vcmask 64512
        %536 = vst.msk [vmem:[%s292] sm:$0xff] %vm535, %v532
        %s537 = sand.u32 %s106, 1
        %s538 = scalar_lea.sflag [#allocation4], %s537
        %s539 = sand.u32 %s106, 1
        %s540 = smul.addr %s539, 16
        %s541 = scalar_lea.vmem [#allocation7], %s540
        %s542 = sand.u32 %s28, 1
        %s543 = scalar_lea.sflag [#allocation9], %s542
        %s544 = sand.u32 %s134, 1
        %s545 = smul.addr %s544, 8
        %s546 = scalar_lea.vmem [#allocation8], %s545
        %s547 = sand.u32 %s28, 1
        %s548 = scalar_lea.sflag [#allocation9], %s547
        %s549 = sand.u32 %s162, 1
        %s550 = scalar_lea.vmem [#allocation10], %s549
        // Predicated region
        $region37: #{tpu_custom_call.1} parent=27 // pred_check
          %p551 = pneg %p116
        $region38: #{tpu_custom_call.1} parent=27 // pred_check_branch
          %553 = sbr.rel (%p551) target = $region40
        $region39: #{tpu_custom_call.1} parent=27 // pred_region
          %s554 = smul.u32 2, %s33
          %s556 = ssub.s32 256, 256
          %557 = vsyncadd %s538, %s556
          %s558 = smul.addr %s32, 2
          %s559 = sadd.s32 %s554, %s558
          %s560 = smul.addr %s559, 128
          %s561 = scalar_lea.hbm %s2, %s560
          %s562 = sshll.u32 %s541, 4
          %s563 = int_to_ptr.vmem [resolvable:$true] %s562
          %568 = dma.vmem_to_hbm [thread:$0]  %s563, 256, %s561, %s538, 128, 128, 8
        $region40: #{tpu_custom_call.1} parent=27 // pred_fallthru
          _
        // Predicated region
        $region41: #{tpu_custom_call.1} parent=27 // pred_check
          %p569 = pneg %p144
        $region42: #{tpu_custom_call.1} parent=27 // pred_check_branch
          %571 = sbr.rel (%p569) target = $region44
        $region43: #{tpu_custom_call.1} parent=27 // pred_region
          %s573 = ssub.s32 128, 128
          %574 = vsyncadd %s543, %s573
          %s575 = sadd.s32 %s33, %s32
          %s576 = smul.addr %s575, 128
          %s577 = scalar_lea.hbm %s3, %s576
          %s579 = sshll.u32 %s546, 4
          %s580 = int_to_ptr.vmem [resolvable:$true] %s579
          %582 = dma.vmem_to_hbm [thread:$0]  %s580, 128, %s577, %s543
        $region44: #{tpu_custom_call.1} parent=27 // pred_fallthru
          _
        // Predicated region
        $region45: #{tpu_custom_call.1} parent=27 // pred_check
          %p583 = pneg %p172
        $region46: #{tpu_custom_call.1} parent=27 // pred_check_branch
          %585 = sbr.rel (%p583) target = $region48
        $region47: #{tpu_custom_call.1} parent=27 // pred_region
          %s587 = ssub.s32 16, 16
          %588 = vsyncadd %s548, %s587
          %s589 = sadd.s32 %s33, %s32
          %s590 = smul.addr %s589, 16
          %s591 = scalar_lea.hbm %s4, %s590
          %s593 = sshll.u32 %s550, 4
          %s594 = int_to_ptr.vmem [resolvable:$true] %s593
          %596 = dma.vmem_to_hbm [thread:$0]  %s594, 16, %s591, %s548
        $region48: #{tpu_custom_call.1} parent=27 // pred_fallthru
          _
      $region28: #{tpu_custom_call.1} parent=5 // pred_fallthru
        _
      %p597 = scmp.le.s32.totalorder 2, %s23
      // Predicated region
      $region49: #{tpu_custom_call.1} parent=5 // pred_check
        %p598 = pneg %p597
      $region50: #{tpu_custom_call.1} parent=5 // pred_check_branch
        %600 = sbr.rel (%p598) target = $region52
      $region51: #{tpu_custom_call.1} parent=5 // pred_region
        %s601 = ssub.s32 %s23, 2
        // Predicated region
        $region53: #{tpu_custom_call.1} parent=51 // pred_check
          %p602 = pneg %p122
        $region54: #{tpu_custom_call.1} parent=51 // pred_check_branch
          %604 = sbr.rel (%p602) target = $region56
        $region55: #{tpu_custom_call.1} parent=51 // pred_region
          %s605 = sand.u32 %s107, 1
          %s606 = scalar_lea.sflag [#allocation4], %s605
          %s607 = sand.u32 %s107, 1
          %s608 = smul.addr %s607, 16
          %s609 = scalar_lea.vmem [#allocation7], %s608
          %610 = dma.done %s606, 256
        $region56: #{tpu_custom_call.1} parent=51 // pred_fallthru
          _
        // Predicated region
        $region57: #{tpu_custom_call.1} parent=51 // pred_check
          %p611 = pneg %p150
        $region58: #{tpu_custom_call.1} parent=51 // pred_check_branch
          %613 = sbr.rel (%p611) target = $region60
        $region59: #{tpu_custom_call.1} parent=51 // pred_region
          %s614 = sand.u32 %s29, 1
          %s615 = scalar_lea.sflag [#allocation9], %s614
          %s616 = sand.u32 %s135, 1
          %s617 = smul.addr %s616, 8
          %s618 = scalar_lea.vmem [#allocation8], %s617
          %619 = dma.done %s615, 128
        $region60: #{tpu_custom_call.1} parent=51 // pred_fallthru
          _
        // Predicated region
        $region61: #{tpu_custom_call.1} parent=51 // pred_check
          %p620 = pneg %p178
        $region62: #{tpu_custom_call.1} parent=51 // pred_check_branch
          %622 = sbr.rel (%p620) target = $region64
        $region63: #{tpu_custom_call.1} parent=51 // pred_region
          %s623 = sand.u32 %s29, 1
          %s624 = scalar_lea.sflag [#allocation9], %s623
          %s625 = sand.u32 %s163, 1
          %s626 = scalar_lea.vmem [#allocation10], %s625
          %627 = dma.done %s624, 16
        $region64: #{tpu_custom_call.1} parent=51 // pred_fallthru
          _
      $region52: #{tpu_custom_call.1} parent=5 // pred_fallthru
        _
    $region6: #{tpu_custom_call.1} parent=1 // loop_footer
      %s27 = sadd.s32 1, %s23
    $region7: #{tpu_custom_call.1} parent=1 // loop_footer_branch
      %22 = sbr.rel target = $region3
    $region8: #{tpu_custom_call.1} parent=1 // loop_exit
      _
    %628 = vsyncpa [#allocation3], 1
    %s629 = scalar_lea.sflag [#allocation3], 1
    %630 = vsyncpa %s629, 1
    %631 = vsyncpa [#allocation6], 1
    %s632 = scalar_lea.sflag [#allocation6], 1
    %633 = vsyncpa %s632, 1
    %634 = vsyncpa [#allocation4], 1
    %s635 = scalar_lea.sflag [#allocation4], 1
    %636 = vsyncpa %s635, 1
    %637 = vsyncpa [#allocation9], 1
    %s638 = scalar_lea.sflag [#allocation9], 1
    %639 = vsyncpa %s638, 1

</llo_original>
